<compile_context>
chip_gen: v5e
topology: v5e:2x2
jax: 0.10.0
libtpu: 0.0.40
codegen_flags: <defaults>
</compile_context>

<pallas_src>
import functools
import math

import jax
import jax.numpy as jnp
from jax.experimental import pallas as pl
from jax.experimental.pallas import tpu as pltpu


def _cross_attn_kernel(xq_ref, xk_ref, xv_ref, res_ref,
                       wq_ref, bq_ref, wk_ref, bk_ref, wv_ref, bv_ref,
                       wo_ref, bo_ref, g_ref, beta_ref,
                       o_ref, acc_ref, *, scale, eps):
    h = pl.program_id(1)
    nh = pl.num_programs(1)

    @pl.when(h == 0)
    def _():
        acc_ref[...] = jnp.zeros_like(acc_ref)

    # Full slabs for this batch element (native dtype — MXU operands).
    xq = xq_ref[0]          # (L, E)
    xk = xk_ref[0]          # (S, E)
    xv = xv_ref[0]          # (S, E)
    dot_dtype = xq.dtype

    # Per-head Q/K/V projections, f32 accumulation on the MXU.
    q = jnp.dot(xq, wq_ref[0], preferred_element_type=jnp.float32) \
        + bq_ref[0].astype(jnp.float32)                              # (L, Dh)
    k = jnp.dot(xk, wk_ref[0], preferred_element_type=jnp.float32) \
        + bk_ref[0].astype(jnp.float32)                              # (S, Dh)
    v = jnp.dot(xv, wv_ref[0], preferred_element_type=jnp.float32) \
        + bv_ref[0].astype(jnp.float32)                              # (S, Dh)

    # Scaled dot-product attention for this head.
    qd = (q * scale).astype(dot_dtype)
    kd = k.astype(dot_dtype)
    s = jax.lax.dot_general(qd, kd, (((1,), (1,)), ((), ())),
                            preferred_element_type=jnp.float32)      # (L, S)

    m = jnp.max(s, axis=-1, keepdims=True)
    p = jnp.exp(s - m)
    p = p / jnp.sum(p, axis=-1, keepdims=True)

    o_h = jnp.dot(p.astype(dot_dtype), v.astype(dot_dtype),
                  preferred_element_type=jnp.float32)                # (L, Dh)

    # This head's contribution to the output projection.
    acc_ref[...] += jnp.dot(o_h.astype(dot_dtype), wo_ref[0],
                            preferred_element_type=jnp.float32)      # (L, E)

    @pl.when(h == nh - 1)
    def _():
        # residual + bias + LayerNorm (all in f32)
        y = acc_ref[...] + bo_ref[...].astype(jnp.float32) \
            + res_ref[0].astype(jnp.float32)
        mean = jnp.mean(y, axis=-1, keepdims=True)
        c = y - mean
        var = jnp.mean(c * c, axis=-1, keepdims=True)
        yn = c * jax.lax.rsqrt(var + eps)
        out = yn * g_ref[...].astype(jnp.float32) + beta_ref[...].astype(jnp.float32)
        o_ref[0] = out.astype(o_ref.dtype)


def cross_attention_layer_forward(tgt, memory, params, *, nhead,
                                  query_pos=None, pos=None, eps=1e-5):
    """tgt: (L, B, E), memory: (S, B, E) (DETR layout). Returns (L, B, E)."""
    L, B, E = tgt.shape
    S = memory.shape[0]
    assert E % nhead == 0, "d_model must be divisible by nhead"
    Dh = E // nhead
    scale = 1.0 / math.sqrt(Dh)

    xq = tgt if query_pos is None else tgt + query_pos
    xk = memory if pos is None else memory + pos

    # batch-first slabs for the kernel
    xq_b = jnp.transpose(xq, (1, 0, 2))       # (B, L, E)
    xk_b = jnp.transpose(xk, (1, 0, 2))       # (B, S, E)
    xv_b = jnp.transpose(memory, (1, 0, 2))   # (B, S, E)
    res_b = jnp.transpose(tgt, (1, 0, 2))     # (B, L, E)

    wq, wk, wv, wo = params["wq"], params["wk"], params["wv"], params["wo"]
    bq, bk, bv, bo = params["bq"], params["bk"], params["bv"], params["bo"]
    gamma, beta = params["gamma"], params["beta"]

    # Pre-slice weights per head so kernel BlockSpecs are full-extent slabs.
    wq3 = wq.reshape(E, nhead, Dh).transpose(1, 0, 2)   # (H, E, Dh)
    wk3 = wk.reshape(E, nhead, Dh).transpose(1, 0, 2)   # (H, E, Dh)
    wv3 = wv.reshape(E, nhead, Dh).transpose(1, 0, 2)   # (H, E, Dh)
    wo3 = wo.reshape(nhead, Dh, E)                      # (H, Dh, E)
    bq3 = bq.reshape(nhead, 1, Dh)
    bk3 = bk.reshape(nhead, 1, Dh)
    bv3 = bv.reshape(nhead, 1, Dh)
    bo_r = bo.reshape(1, E)
    g_r = gamma.reshape(1, E)
    b_r = beta.reshape(1, E)

    kernel = functools.partial(_cross_attn_kernel, scale=scale, eps=eps)

    out_b = pl.pallas_call(
        kernel,
        out_shape=jax.ShapeDtypeStruct((B, L, E), tgt.dtype),
        grid_spec=pltpu.PrefetchScalarGridSpec(
            num_scalar_prefetch=0,
            grid=(B, nhead),
            in_specs=[
                pl.BlockSpec((1, L, E), lambda b, h: (b, 0, 0)),    # xq (tgt+query_pos)
                pl.BlockSpec((1, S, E), lambda b, h: (b, 0, 0)),    # xk (memory+pos)
                pl.BlockSpec((1, S, E), lambda b, h: (b, 0, 0)),    # xv (memory)
                pl.BlockSpec((1, L, E), lambda b, h: (b, 0, 0)),    # residual (tgt)
                pl.BlockSpec((1, E, Dh), lambda b, h: (h, 0, 0)),   # Wq[h]
                pl.BlockSpec((1, 1, Dh), lambda b, h: (h, 0, 0)),   # bq[h]
                pl.BlockSpec((1, E, Dh), lambda b, h: (h, 0, 0)),   # Wk[h]
                pl.BlockSpec((1, 1, Dh), lambda b, h: (h, 0, 0)),   # bk[h]
                pl.BlockSpec((1, E, Dh), lambda b, h: (h, 0, 0)),   # Wv[h]
                pl.BlockSpec((1, 1, Dh), lambda b, h: (h, 0, 0)),   # bv[h]
                pl.BlockSpec((1, Dh, E), lambda b, h: (h, 0, 0)),   # Wo[h]
                pl.BlockSpec((1, E), lambda b, h: (0, 0)),          # bo
                pl.BlockSpec((1, E), lambda b, h: (0, 0)),          # gamma
                pl.BlockSpec((1, E), lambda b, h: (0, 0)),          # beta
            ],
            out_specs=pl.BlockSpec((1, L, E), lambda b, h: (b, 0, 0)),
            scratch_shapes=[pltpu.VMEM((L, E), jnp.float32)],       # out-proj accumulator
        ),
        compiler_params=pltpu.CompilerParams(
            dimension_semantics=("parallel", "arbitrary"),
            vmem_limit_bytes=48 * 1024 * 1024,
        ),
    )(xq_b, xk_b, xv_b, res_b, wq3, bq3, wk3, bk3, wv3, bv3, wo3, bo_r, g_r, b_r)

    return jnp.transpose(out_b, (1, 0, 2))   # back to (L, B, E)


def _xavier_uniform(key, shape, dtype=jnp.float32):
    # matches nn.init.xavier_uniform_ on a PyTorch (out_features, in_features) weight
    fan_out, fan_in = shape
    limit = (6.0 / (fan_in + fan_out)) ** 0.5
    return jax.random.uniform(key, shape, dtype, minval=-limit, maxval=limit)


def init_cross_attention_params(key, d_model):
    k1, k2 = jax.random.split(key)
    # nn.MultiheadAttention packs q/k/v into one (3E, E) in_proj_weight; the
    # layer's _reset_parameters applies xavier_uniform_ to that whole matrix.
    in_proj = _xavier_uniform(k1, (3 * d_model, d_model))
    wq = in_proj[:d_model].T                 # stored as (in, out)
    wk = in_proj[d_model:2 * d_model].T
    wv = in_proj[2 * d_model:].T
    wo = _xavier_uniform(k2, (d_model, d_model)).T
    zeros = lambda n: jnp.zeros((n,), jnp.float32)   # MHA / out_proj biases init to 0
    return dict(wq=wq, wk=wk, wv=wv, wo=wo,
                bq=zeros(d_model), bk=zeros(d_model), bv=zeros(d_model),
                bo=zeros(d_model),
                gamma=jnp.ones((d_model,), jnp.float32),
                beta=jnp.zeros((d_model,), jnp.float32))


def _reference(tgt, memory, params, nhead, query_pos=None, pos=None, eps=1e-5):
    L, B, E = tgt.shape
    S = memory.shape[0]
    Dh = E // nhead
    scale = 1.0 / math.sqrt(Dh)
    xq = tgt if query_pos is None else tgt + query_pos
    xk = memory if pos is None else memory + pos
    q = xq @ params["wq"] + params["bq"]
    k = xk @ params["wk"] + params["bk"]
    v = memory @ params["wv"] + params["bv"]
    qh = q.reshape(L, B, nhead, Dh)
    kh = k.reshape(S, B, nhead, Dh)
    vh = v.reshape(S, B, nhead, Dh)
    s = jnp.einsum("lbhd,sbhd->bhls", qh, kh) * scale
    p = jax.nn.softmax(s, axis=-1)
    o = jnp.einsum("bhls,sbhd->lbhd", p, vh).reshape(L, B, E)
    attn = o @ params["wo"] + params["bo"]
    y = tgt + attn
    mean = jnp.mean(y, axis=-1, keepdims=True)
    var = jnp.mean((y - mean) ** 2, axis=-1, keepdims=True)
    return (y - mean) * jax.lax.rsqrt(var + eps) * params["gamma"] + params["beta"]


if __name__ == "__main__":
    key = jax.random.PRNGKey(0)
    L, S, B, d_model, nhead = 8, 16, 2, 128, 4   # small, lane-aligned demo shapes

    kp, kt, km, kq, kpo = jax.random.split(key, 5)
    params = init_cross_attention_params(kp, d_model)
    tgt = jax.random.normal(kt, (L, B, d_model), jnp.float32)
    memory = jax.random.normal(km, (S, B, d_model), jnp.float32)
    query_pos = jax.random.normal(kq, (L, B, d_model), jnp.float32)
    pos = jax.random.normal(kpo, (S, B, d_model), jnp.float32)

    out = cross_attention_layer_forward(tgt, memory, params, nhead=nhead,
                                        query_pos=query_pos, pos=pos)
    out = jax.block_until_ready(out)

    ref = _reference(tgt, memory, params, nhead, query_pos=query_pos, pos=pos)
    assert out.shape == tgt.shape
    assert jnp.allclose(out, ref, atol=2e-4, rtol=2e-4), "mismatch vs reference"

    print("KERNEL_OK")
</pallas_src>

<mosaic_0001>
module attributes {stable_mosaic.version = 11 : i64} {
  func.func @_cross_attn_kernel(%arg0: i32, %arg1: i32, %arg2: memref<1x8x128xf32, #tpu.memory_space<vmem>>, %arg3: memref<1x16x128xf32, #tpu.memory_space<vmem>>, %arg4: memref<1x16x128xf32, #tpu.memory_space<vmem>>, %arg5: memref<1x8x128xf32, #tpu.memory_space<vmem>>, %arg6: memref<1x128x32xf32, #tpu.memory_space<vmem>>, %arg7: memref<1x1x32xf32, #tpu.memory_space<vmem>>, %arg8: memref<1x128x32xf32, #tpu.memory_space<vmem>>, %arg9: memref<1x1x32xf32, #tpu.memory_space<vmem>>, %arg10: memref<1x128x32xf32, #tpu.memory_space<vmem>>, %arg11: memref<1x1x32xf32, #tpu.memory_space<vmem>>, %arg12: memref<1x32x128xf32, #tpu.memory_space<vmem>>, %arg13: memref<1x128xf32, #tpu.memory_space<vmem>>, %arg14: memref<1x128xf32, #tpu.memory_space<vmem>>, %arg15: memref<1x128xf32, #tpu.memory_space<vmem>>, %arg16: memref<1x8x128xf32, #tpu.memory_space<vmem>>, %arg17: memref<8x128xf32, #tpu.memory_space<vmem>>) attributes {dimension_semantics = [#tpu.dimension_semantics<parallel>, #tpu.dimension_semantics<arbitrary>], iteration_bounds = array<i64: 2, 4>, scalar_prefetch = 0 : i64, scratch_operands = 1 : i64, tpu.core_type = #tpu.core_type<tc>, window_params = [{transform_indices = @transform_0, window_bounds = array<i64: 1, 8, 128>}, {transform_indices = @transform_1, window_bounds = array<i64: 1, 16, 128>}, {transform_indices = @transform_2, window_bounds = array<i64: 1, 16, 128>}, {transform_indices = @transform_3, window_bounds = array<i64: 1, 8, 128>}, {transform_indices = @transform_4, window_bounds = array<i64: 1, 128, 32>}, {transform_indices = @transform_5, window_bounds = array<i64: 1, 1, 32>}, {transform_indices = @transform_6, window_bounds = array<i64: 1, 128, 32>}, {transform_indices = @transform_7, window_bounds = array<i64: 1, 1, 32>}, {transform_indices = @transform_8, window_bounds = array<i64: 1, 128, 32>}, {transform_indices = @transform_9, window_bounds = array<i64: 1, 1, 32>}, {transform_indices = @transform_10, window_bounds = array<i64: 1, 32, 128>}, {pipeline_mode = #tpu.pipeline_mode<synchronous>, transform_indices = @transform_11, window_bounds = array<i64: 1, 128>}, {pipeline_mode = #tpu.pipeline_mode<synchronous>, transform_indices = @transform_12, window_bounds = array<i64: 1, 128>}, {pipeline_mode = #tpu.pipeline_mode<synchronous>, transform_indices = @transform_13, window_bounds = array<i64: 1, 128>}, {transform_indices = @transform_14, window_bounds = array<i64: 1, 8, 128>}]} {
    %c0_i32 = arith.constant 0 : i32
    %0 = arith.cmpi eq, %arg1, %c0_i32 : i32
    %1 = arith.extui %0 : i1 to i32
    %c0_i32_0 = arith.constant 0 : i32
    %2 = arith.cmpi ne, %1, %c0_i32_0 : i32
    scf.if %2 {
      %cst_43 = arith.constant 0.000000e+00 : f32
      %52 = vector.broadcast %cst_43 : f32 to vector<8x128xf32>
      %c0_44 = arith.constant 0 : index
      %c0_45 = arith.constant 0 : index
      %53 = vector.load %arg17[%c0_44, %c0_45] : memref<8x128xf32, #tpu.memory_space<vmem>>, vector<8x128xf32>
      tpu.vector_store %arg17[%c0_44, %c0_45], %52 {strides = array<i32>} : memref<8x128xf32, #tpu.memory_space<vmem>>, vector<8x128xf32>,
    } else {
    }
    %c0 = arith.constant 0 : index
    %c0_1 = arith.constant 0 : index
    %c0_2 = arith.constant 0 : index
    %3 = vector.load %arg2[%c0, %c0_1, %c0_2] : memref<1x8x128xf32, #tpu.memory_space<vmem>>, vector<1x8x128xf32>
    %4 = vector.shape_cast %3 : vector<1x8x128xf32> to vector<8x128xf32>
    %c0_3 = arith.constant 0 : index
    %c0_4 = arith.constant 0 : index
    %c0_5 = arith.constant 0 : index
    %5 = vector.load %arg3[%c0_3, %c0_4, %c0_5] : memref<1x16x128xf32, #tpu.memory_space<vmem>>, vector<1x16x128xf32>
    %6 = vector.shape_cast %5 : vector<1x16x128xf32> to vector<16x128xf32>
    %c0_6 = arith.constant 0 : index
    %c0_7 = arith.constant 0 : index
    %c0_8 = arith.constant 0 : index
    %7 = vector.load %arg4[%c0_6, %c0_7, %c0_8] : memref<1x16x128xf32, #tpu.memory_space<vmem>>, vector<1x16x128xf32>
    %8 = vector.shape_cast %7 : vector<1x16x128xf32> to vector<16x128xf32>
    %c0_9 = arith.constant 0 : index
    %c0_10 = arith.constant 0 : index
    %c0_11 = arith.constant 0 : index
    %9 = vector.load %arg6[%c0_9, %c0_10, %c0_11] : memref<1x128x32xf32, #tpu.memory_space<vmem>>, vector<1x128x32xf32>
    %10 = vector.shape_cast %9 : vector<1x128x32xf32> to vector<128x32xf32>
    %cst = arith.constant dense<0.000000e+00> : vector<8x32xf32>
    %11 = tpu.matmul %4, %10, %cst {dimension_numbers = #tpu.dot_dimension_numbers<[1], [0], [0], [1], [0, 0, 1, 1], [], []>} : vector<8x128xf32>, vector<128x32xf32>, vector<8x32xf32> -> vector<8x32xf32>
    %c0_12 = arith.constant 0 : index
    %c0_13 = arith.constant 0 : index
    %c0_14 = arith.constant 0 : index
    %12 = vector.load %arg7[%c0_12, %c0_13, %c0_14] : memref<1x1x32xf32, #tpu.memory_space<vmem>>, vector<1x1x32xf32>
    %13 = vector.shape_cast %12 : vector<1x1x32xf32> to vector<1x32xf32>
    %14 = vector.broadcast %13 : vector<1x32xf32> to vector<8x32xf32>
    %15 = arith.addf %11, %14 : vector<8x32xf32>
    %c0_15 = arith.constant 0 : index
    %c0_16 = arith.constant 0 : index
    %c0_17 = arith.constant 0 : index
    %16 = vector.load %arg8[%c0_15, %c0_16, %c0_17] : memref<1x128x32xf32, #tpu.memory_space<vmem>>, vector<1x128x32xf32>
    %17 = vector.shape_cast %16 : vector<1x128x32xf32> to vector<128x32xf32>
    %cst_18 = arith.constant dense<0.000000e+00> : vector<16x32xf32>
    %18 = tpu.matmul %6, %17, %cst_18 {dimension_numbers = #tpu.dot_dimension_numbers<[1], [0], [0], [1], [0, 0, 1, 1], [], []>} : vector<16x128xf32>, vector<128x32xf32>, vector<16x32xf32> -> vector<16x32xf32>
    %c0_19 = arith.constant 0 : index
    %c0_20 = arith.constant 0 : index
    %c0_21 = arith.constant 0 : index
    %19 = vector.load %arg9[%c0_19, %c0_20, %c0_21] : memref<1x1x32xf32, #tpu.memory_space<vmem>>, vector<1x1x32xf32>
    %20 = vector.shape_cast %19 : vector<1x1x32xf32> to vector<1x32xf32>
    %21 = vector.broadcast %20 : vector<1x32xf32> to vector<16x32xf32>
    %22 = arith.addf %18, %21 : vector<16x32xf32>
    %c0_22 = arith.constant 0 : index
    %c0_23 = arith.constant 0 : index
    %c0_24 = arith.constant 0 : index
    %23 = vector.load %arg10[%c0_22, %c0_23, %c0_24] : memref<1x128x32xf32, #tpu.memory_space<vmem>>, vector<1x128x32xf32>
    %24 = vector.shape_cast %23 : vector<1x128x32xf32> to vector<128x32xf32>
    %cst_25 = arith.constant dense<0.000000e+00> : vector<16x32xf32>
    %25 = tpu.matmul %8, %24, %cst_25 {dimension_numbers = #tpu.dot_dimension_numbers<[1], [0], [0], [1], [0, 0, 1, 1], [], []>} : vector<16x128xf32>, vector<128x32xf32>, vector<16x32xf32> -> vector<16x32xf32>
    %c0_26 = arith.constant 0 : index
    %c0_27 = arith.constant 0 : index
    %c0_28 = arith.constant 0 : index
    %26 = vector.load %arg11[%c0_26, %c0_27, %c0_28] : memref<1x1x32xf32, #tpu.memory_space<vmem>>, vector<1x1x32xf32>
    %27 = vector.shape_cast %26 : vector<1x1x32xf32> to vector<1x32xf32>
    %28 = vector.broadcast %27 : vector<1x32xf32> to vector<16x32xf32>
    %29 = arith.addf %25, %28 : vector<16x32xf32>
    %cst_29 = arith.constant 0.176776692 : f32
    %30 = vector.broadcast %cst_29 : f32 to vector<8x32xf32>
    %31 = arith.mulf %15, %30 : vector<8x32xf32>
    %cst_30 = arith.constant dense<0.000000e+00> : vector<8x16xf32>
    %32 = tpu.matmul %31, %22, %cst_30 {dimension_numbers = #tpu.dot_dimension_numbers<[1], [1], [0], [0], [0, 0, 1, 0], [], []>} : vector<8x32xf32>, vector<16x32xf32>, vector<8x16xf32> -> vector<8x16xf32>
    %cst_31 = arith.constant dense<0xFF800000> : vector<8xf32>
    %33 = vector.multi_reduction <maximumf>, %32, %cst_31 [1] : vector<8x16xf32> to vector<8xf32>
    %34 = vector.shape_cast %33 : vector<8xf32> to vector<8x1xf32>
    %35 = vector.broadcast %34 : vector<8x1xf32> to vector<8x16xf32>
    %36 = arith.subf %32, %35 : vector<8x16xf32>
    %37 = math.exp %36 : vector<8x16xf32>
    %cst_32 = arith.constant dense<0.000000e+00> : vector<8xf32>
    %38 = vector.multi_reduction <add>, %37, %cst_32 [1] : vector<8x16xf32> to vector<8xf32>
    %39 = vector.shape_cast %38 : vector<8xf32> to vector<8x1xf32>
    %40 = vector.broadcast %39 : vector<8x1xf32> to vector<8x16xf32>
    %41 = arith.divf %37, %40 : vector<8x16xf32>
    %cst_33 = arith.constant dense<0.000000e+00> : vector<8x32xf32>
    %42 = tpu.matmul %41, %29, %cst_33 {dimension_numbers = #tpu.dot_dimension_numbers<[1], [0], [0], [1], [0, 0, 1, 1], [], []>} : vector<8x16xf32>, vector<16x32xf32>, vector<8x32xf32> -> vector<8x32xf32>
    %c0_34 = arith.constant 0 : index
    %c0_35 = arith.constant 0 : index
    %43 = vector.load %arg17[%c0_34, %c0_35] : memref<8x128xf32, #tpu.memory_space<vmem>>, vector<8x128xf32>
    %c0_36 = arith.constant 0 : index
    %c0_37 = arith.constant 0 : index
    %c0_38 = arith.constant 0 : index
    %44 = vector.load %arg12[%c0_36, %c0_37, %c0_38] : memref<1x32x128xf32, #tpu.memory_space<vmem>>, vector<1x32x128xf32>
    %45 = vector.shape_cast %44 : vector<1x32x128xf32> to vector<32x128xf32>
    %cst_39 = arith.constant dense<0.000000e+00> : vector<8x128xf32>
    %46 = tpu.matmul %42, %45, %cst_39 {dimension_numbers = #tpu.dot_dimension_numbers<[1], [0], [0], [1], [0, 0, 1, 1], [], []>} : vector<8x32xf32>, vector<32x128xf32>, vector<8x128xf32> -> vector<8x128xf32>
    %47 = arith.addf %43, %46 : vector<8x128xf32>
    %c0_40 = arith.constant 0 : index
    %c0_41 = arith.constant 0 : index
    %48 = vector.load %arg17[%c0_40, %c0_41] : memref<8x128xf32, #tpu.memory_space<vmem>>, vector<8x128xf32>
    tpu.vector_store %arg17[%c0_40, %c0_41], %47 {strides = array<i32>} : memref<8x128xf32, #tpu.memory_space<vmem>>, vector<8x128xf32>,
    %c3_i32 = arith.constant 3 : i32
    %49 = arith.cmpi eq, %arg1, %c3_i32 : i32
    %50 = arith.extui %49 : i1 to i32
    %c0_i32_42 = arith.constant 0 : i32
    %51 = arith.cmpi ne, %50, %c0_i32_42 : i32
    scf.if %51 {
      %c0_43 = arith.constant 0 : index
      %c0_44 = arith.constant 0 : index
      %52 = vector.load %arg17[%c0_43, %c0_44] : memref<8x128xf32, #tpu.memory_space<vmem>>, vector<8x128xf32>
      %c0_45 = arith.constant 0 : index
      %c0_46 = arith.constant 0 : index
      %53 = vector.load %arg13[%c0_45, %c0_46] : memref<1x128xf32, #tpu.memory_space<vmem>>, vector<1x128xf32>
      %54 = vector.broadcast %53 : vector<1x128xf32> to vector<8x128xf32>
      %55 = arith.addf %52, %54 : vector<8x128xf32>
      %c0_47 = arith.constant 0 : index
      %c0_48 = arith.constant 0 : index
      %c0_49 = arith.constant 0 : index
      %56 = vector.load %arg5[%c0_47, %c0_48, %c0_49] : memref<1x8x128xf32, #tpu.memory_space<vmem>>, vector<1x8x128xf32>
      %57 = vector.shape_cast %56 : vector<1x8x128xf32> to vector<8x128xf32>
      %58 = arith.addf %55, %57 : vector<8x128xf32>
      %cst_50 = arith.constant dense<0.000000e+00> : vector<8xf32>
      %59 = vector.multi_reduction <add>, %58, %cst_50 [1] : vector<8x128xf32> to vector<8xf32>
      %60 = vector.shape_cast %59 : vector<8xf32> to vector<8x1xf32>
      %cst_51 = arith.constant 1.280000e+02 : f32
      %61 = vector.broadcast %cst_51 : f32 to vector<8x1xf32>
      %62 = arith.divf %60, %61 : vector<8x1xf32>
      %63 = vector.broadcast %62 : vector<8x1xf32> to vector<8x128xf32>
      %64 = arith.subf %58, %63 : vector<8x128xf32>
      %65 = arith.mulf %64, %64 : vector<8x128xf32>
      %cst_52 = arith.constant dense<0.000000e+00> : vector<8xf32>
      %66 = vector.multi_reduction <add>, %65, %cst_52 [1] : vector<8x128xf32> to vector<8xf32>
      %67 = vector.shape_cast %66 : vector<8xf32> to vector<8x1xf32>
      %cst_53 = arith.constant 1.280000e+02 : f32
      %68 = vector.broadcast %cst_53 : f32 to vector<8x1xf32>
      %69 = arith.divf %67, %68 : vector<8x1xf32>
      %cst_54 = arith.constant 9.99999974E-6 : f32
      %70 = vector.broadcast %cst_54 : f32 to vector<8x1xf32>
      %71 = arith.addf %69, %70 : vector<8x1xf32>
      %72 = math.rsqrt %71 : vector<8x1xf32>
      %73 = vector.broadcast %72 : vector<8x1xf32> to vector<8x128xf32>
      %74 = arith.mulf %64, %73 : vector<8x128xf32>
      %c0_55 = arith.constant 0 : index
      %c0_56 = arith.constant 0 : index
      %75 = vector.load %arg14[%c0_55, %c0_56] : memref<1x128xf32, #tpu.memory_space<vmem>>, vector<1x128xf32>
      %76 = vector.broadcast %75 : vector<1x128xf32> to vector<8x128xf32>
      %77 = arith.mulf %74, %76 : vector<8x128xf32>
      %c0_57 = arith.constant 0 : index
      %c0_58 = arith.constant 0 : index
      %78 = vector.load %arg15[%c0_57, %c0_58] : memref<1x128xf32, #tpu.memory_space<vmem>>, vector<1x128xf32>
      %79 = vector.broadcast %78 : vector<1x128xf32> to vector<8x128xf32>
      %80 = arith.addf %77, %79 : vector<8x128xf32>
      %c0_59 = arith.constant 0 : index
      %c0_60 = arith.constant 0 : index
      %c0_61 = arith.constant 0 : index
      %81 = vector.load %arg16[%c0_59, %c0_60, %c0_61] : memref<1x8x128xf32, #tpu.memory_space<vmem>>, vector<1x8x128xf32>
      %82 = vector.shape_cast %81 : vector<1x8x128xf32> to vector<8x128xf32>
      %83 = vector.shape_cast %80 : vector<8x128xf32> to vector<1x8x128xf32>
      tpu.vector_store %arg16[%c0_59, %c0_60, %c0_61], %83 {strides = array<i32>} : memref<1x8x128xf32, #tpu.memory_space<vmem>>, vector<1x8x128xf32>,
    } else {
    }
    return
  }
  func.func @transform_0(%arg0: i32, %arg1: i32) -> (i32, i32, i32) {
    %c0_i32 = arith.constant 0 : i32
    %c0_i32_0 = arith.constant 0 : i32
    %c0_i32_1 = arith.constant 0 : i32
    return %arg0, %c0_i32, %c0_i32_0 : i32, i32, i32
  }
  func.func @transform_1(%arg0: i32, %arg1: i32) -> (i32, i32, i32) {
    %c0_i32 = arith.constant 0 : i32
    %c0_i32_0 = arith.constant 0 : i32
    %c0_i32_1 = arith.constant 0 : i32
    return %arg0, %c0_i32, %c0_i32_0 : i32, i32, i32
  }
  func.func @transform_2(%arg0: i32, %arg1: i32) -> (i32, i32, i32) {
    %c0_i32 = arith.constant 0 : i32
    %c0_i32_0 = arith.constant 0 : i32
    %c0_i32_1 = arith.constant 0 : i32
    return %arg0, %c0_i32, %c0_i32_0 : i32, i32, i32
  }
  func.func @transform_3(%arg0: i32, %arg1: i32) -> (i32, i32, i32) {
    %c0_i32 = arith.constant 0 : i32
    %c0_i32_0 = arith.constant 0 : i32
    %c0_i32_1 = arith.constant 0 : i32
    return %arg0, %c0_i32, %c0_i32_0 : i32, i32, i32
  }
  func.func @transform_4(%arg0: i32, %arg1: i32) -> (i32, i32, i32) {
    %c0_i32 = arith.constant 0 : i32
    %c0_i32_0 = arith.constant 0 : i32
    %c0_i32_1 = arith.constant 0 : i32
    return %arg1, %c0_i32, %c0_i32_0 : i32, i32, i32
  }
  func.func @transform_5(%arg0: i32, %arg1: i32) -> (i32, i32, i32) {
    %c0_i32 = arith.constant 0 : i32
    %c0_i32_0 = arith.constant 0 : i32
    %c0_i32_1 = arith.constant 0 : i32
    return %arg1, %c0_i32, %c0_i32_0 : i32, i32, i32
  }
  func.func @transform_6(%arg0: i32, %arg1: i32) -> (i32, i32, i32) {
    %c0_i32 = arith.constant 0 : i32
    %c0_i32_0 = arith.constant 0 : i32
    %c0_i32_1 = arith.constant 0 : i32
    return %arg1, %c0_i32, %c0_i32_0 : i32, i32, i32
  }
  func.func @transform_7(%arg0: i32, %arg1: i32) -> (i32, i32, i32) {
    %c0_i32 = arith.constant 0 : i32
    %c0_i32_0 = arith.constant 0 : i32
    %c0_i32_1 = arith.constant 0 : i32
    return %arg1, %c0_i32, %c0_i32_0 : i32, i32, i32
  }
  func.func @transform_8(%arg0: i32, %arg1: i32) -> (i32, i32, i32) {
    %c0_i32 = arith.constant 0 : i32
    %c0_i32_0 = arith.constant 0 : i32
    %c0_i32_1 = arith.constant 0 : i32
    return %arg1, %c0_i32, %c0_i32_0 : i32, i32, i32
  }
  func.func @transform_9(%arg0: i32, %arg1: i32) -> (i32, i32, i32) {
    %c0_i32 = arith.constant 0 : i32
    %c0_i32_0 = arith.constant 0 : i32
    %c0_i32_1 = arith.constant 0 : i32
    return %arg1, %c0_i32, %c0_i32_0 : i32, i32, i32
  }
  func.func @transform_10(%arg0: i32, %arg1: i32) -> (i32, i32, i32) {
    %c0_i32 = arith.constant 0 : i32
    %c0_i32_0 = arith.constant 0 : i32
    %c0_i32_1 = arith.constant 0 : i32
    return %arg1, %c0_i32, %c0_i32_0 : i32, i32, i32
  }
  func.func @transform_11(%arg0: i32, %arg1: i32) -> (i32, i32) {
    %c0_i32 = arith.constant 0 : i32
    %c0_i32_0 = arith.constant 0 : i32
    %c0_i32_1 = arith.constant 0 : i32
    return %c0_i32, %c0_i32_0 : i32, i32
  }
  func.func @transform_12(%arg0: i32, %arg1: i32) -> (i32, i32) {
    %c0_i32 = arith.constant 0 : i32
    %c0_i32_0 = arith.constant 0 : i32
    %c0_i32_1 = arith.constant 0 : i32
    return %c0_i32, %c0_i32_0 : i32, i32
  }
  func.func @transform_13(%arg0: i32, %arg1: i32) -> (i32, i32) {
    %c0_i32 = arith.constant 0 : i32
    %c0_i32_0 = arith.constant 0 : i32
    %c0_i32_1 = arith.constant 0 : i32
    return %c0_i32, %c0_i32_0 : i32, i32
  }
  func.func @transform_14(%arg0: i32, %arg1: i32) -> (i32, i32, i32) {
    %c0_i32 = arith.constant 0 : i32
    %c0_i32_0 = arith.constant 0 : i32
    %c0_i32_1 = arith.constant 0 : i32
    return %arg0, %c0_i32, %c0_i32_0 : i32, i32, i32
  }
}

</mosaic_0001>

<llo_original>
// kernel: tpu_custom_call.1
$region0: #{tpu_custom_call.1}
  #allocation0 [shape = 'u32[]', space=smem, size = 0x4, offset = 0x4, fixed_abs, tag = 'smem constant byte address 0x4 - core index']
  #allocation1 [shape = 'u32[72,128]{1,0:T(1,128)}', space=vmem, size = 0x9000, scoped, tag = 'internal scratch']
  #allocation2 [shape = 'f32[8,128]{1,0:T(8,128)}', space=vmem, size = 0x1000, scoped, tag = 'scratch operand']
  %s0 = inlined_call_operand.vmem [shape: f32[2,8,128], index: 0, kind: input, shape index: {}]
  %s1 = inlined_call_operand.vmem [shape: f32[2,16,128], index: 1, kind: input, shape index: {}]
  %s2 = inlined_call_operand.vmem [shape: f32[2,16,128], index: 2, kind: input, shape index: {}]
  %s3 = inlined_call_operand.vmem [shape: f32[2,8,128], index: 3, kind: input, shape index: {}]
  %s4 = inlined_call_operand.vmem [shape: f32[4,128,32], index: 4, kind: input, shape index: {}]
  %s5 = inlined_call_operand.vmem [shape: f32[4,1,32], index: 5, kind: input, shape index: {}]
  %s6 = inlined_call_operand.vmem [shape: f32[4,128,32], index: 6, kind: input, shape index: {}]
  %s7 = inlined_call_operand.vmem [shape: f32[4,1,32], index: 7, kind: input, shape index: {}]
  %s8 = inlined_call_operand.vmem [shape: f32[4,128,32], index: 8, kind: input, shape index: {}]
  %s9 = inlined_call_operand.vmem [shape: f32[4,1,32], index: 9, kind: input, shape index: {}]
  %s10 = inlined_call_operand.vmem [shape: f32[4,32,128], index: 10, kind: input, shape index: {}]
  %s11 = inlined_call_operand.vmem [shape: f32[1,128], index: 11, kind: input, shape index: {}]
  %s12 = inlined_call_operand.vmem [shape: f32[1,128], index: 12, kind: input, shape index: {}]
  %s13 = inlined_call_operand.vmem [shape: f32[1,128], index: 13, kind: input, shape index: {}]
  %s14 = inlined_call_operand.hbm [shape: f32[2,8,128], index: 14, kind: output, shape index: {}]
  %s15 = sld [smem:[#allocation0]]
  $region97: #{tpu_custom_call.1} parent=0
    _
  %s17 = ssub.s32 1, %s15
  %s18 = scalar_select 0, %s17, %s15
  $region1: #{tpu_custom_call.1} parent=0
    #allocation3 [shape = 'u8[8192]{0}', space=vmem, size = 0x2000, scoped, tag = 'output window, operand 0']
    #allocation4 [shape = 's32[2]{0}', space=sflag, size = 0x8, scoped, tag = 'scoped memory for tpu_custom_call.1']
    %19 = vsyncpa [#allocation4], 0
    %s20 = scalar_lea.sflag [#allocation4], 1
    %21 = vsyncpa %s20, 0
    loop: start=0, step=1, limit=10
    $region2: #{tpu_custom_call.1} parent=1 // loop_pre_header
      _
    $region3: #{tpu_custom_call.1} parent=1 // loop_header
      %s23 = sphi 0, %s27
      %p24 = scmp.ge.s32.totalorder %s23, 10
      %s30 = sphi 0, %s42
      %s31 = sphi 0, %s38
      %s32 = sphi 0, %s30
      %s33 = sphi 0, %s31
      %s34 = sphi 0, %s32
      %s35 = sphi 0, %s33
      %s45 = sphi 0, %s47
      %s48 = sphi 0, %s45
      %s49 = sphi 0, %s48
      %s65 = sphi 0, %s49
      %s71 = sphi 0, %s73
      %s74 = sphi 0, %s71
      %s75 = sphi 0, %s74
      %s91 = sphi 0, %s75
      %s97 = sphi 0, %s99
      %s100 = sphi 0, %s97
      %s101 = sphi 0, %s100
      %s117 = sphi 0, %s101
      %s123 = sphi 0, %s125
      %s126 = sphi 0, %s123
      %s127 = sphi 0, %s126
      %s143 = sphi 0, %s127
      %s149 = sphi 0, %s151
      %s152 = sphi 0, %s149
      %s153 = sphi 0, %s152
      %s169 = sphi 0, %s153
      %s175 = sphi 0, %s177
      %s178 = sphi 0, %s175
      %s179 = sphi 0, %s178
      %s195 = sphi 0, %s179
      %s201 = sphi 0, %s203
      %s204 = sphi 0, %s201
      %s205 = sphi 0, %s204
      %s221 = sphi 0, %s205
      %s227 = sphi 0, %s229
      %s230 = sphi 0, %s227
      %s231 = sphi 0, %s230
      %s247 = sphi 0, %s231
      %s253 = sphi 0, %s255
      %s256 = sphi 0, %s253
      %s257 = sphi 0, %s256
      %s273 = sphi 0, %s257
      %s279 = sphi 0, %s281
      %s282 = sphi 0, %s279
      %s283 = sphi 0, %s282
      %s299 = sphi 0, %s283
      %s305 = sphi 0, %s307
      %s308 = sphi 0, %s305
      %s309 = sphi 0, %s308
      %s325 = sphi 0, %s309
      %s329 = sphi 0, %s329
      %s331 = sphi 0, %s329
      %s332 = sphi 0, %s331
      %s346 = sphi 0, %s332
      %s350 = sphi 0, %s350
      %s352 = sphi 0, %s350
      %s353 = sphi 0, %s352
      %s367 = sphi 0, %s353
      %s371 = sphi 0, %s371
      %s373 = sphi 0, %s371
      %s374 = sphi 0, %s373
      %s388 = sphi 0, %s374
      %s394 = sphi 0, %s396
      %s397 = sphi 0, %s394
      %s398 = sphi 0, %s397
      %s414 = sphi 0, %s398
    $region4: #{tpu_custom_call.1} parent=1 // loop_header_branch
      %26 = sbr.rel (%p24) target = $region8
    $region5: #{tpu_custom_call.1} parent=1 // loop_body
      %s28 = ssub.s32 %s23, 1
      %s29 = ssub.s32 %s23, 2
      %s36 = sadd.s32 1, %s31
      %p37 = scmp.ge.s32.totalorder %s36, 4
      %s38 = scalar_select %p37, 0, %s36
      %s39 = sadd.s32 1, %s30
      %s40 = scalar_select %p37, %s39, %s30
      %p41 = scmp.ge.s32.totalorder %s40, 2
      %s42 = scalar_select %p41, 0, %s40
      %s43 = ssub.s32 %s30, %s42
      %p44 = scmp.eq.s32.totalorder %s43, 0
      %s46 = sadd.s32 %s45, 1
      %s47 = scalar_select %p44, %s45, %s46
      %p50 = pneg %p44
      %p51 = scmp.eq.s32.totalorder %s23, 7
      %p52 = por %p50, %p51
      %p53 = scmp.ne.s32.totalorder %s45, %s48
      %p54 = scmp.eq.s32.totalorder %s23, 0
      %p55 = por %p53, %p54
      %p56 = scmp.ne.s32.totalorder %s45, %s48
      %p57 = scmp.eq.s32.totalorder %s28, 7
      %p58 = por %p56, %p57
      %p59 = scmp.ne.s32.totalorder %s48, %s49
      %p60 = scmp.eq.s32.totalorder %s28, 0
      %p61 = por %p59, %p60
      %p62 = scmp.ne.s32.totalorder %s48, %s49
      %p63 = scmp.eq.s32.totalorder %s29, 7
      %p64 = por %p62, %p63
      %p66 = scmp.ne.s32.totalorder %s49, %s65
      %p67 = scmp.eq.s32.totalorder %s29, 0
      %p68 = por %p66, %p67
      %s69 = ssub.s32 %s30, %s42
      %p70 = scmp.eq.s32.totalorder %s69, 0
      %s72 = sadd.s32 %s71, 1
      %s73 = scalar_select %p70, %s71, %s72
      %p76 = pneg %p70
      %p77 = scmp.eq.s32.totalorder %s23, 7
      %p78 = por %p76, %p77
      %p79 = scmp.ne.s32.totalorder %s71, %s74
      %p80 = scmp.eq.s32.totalorder %s23, 0
      %p81 = por %p79, %p80
      %p82 = scmp.ne.s32.totalorder %s71, %s74
      %p83 = scmp.eq.s32.totalorder %s28, 7
      %p84 = por %p82, %p83
      %p85 = scmp.ne.s32.totalorder %s74, %s75
      %p86 = scmp.eq.s32.totalorder %s28, 0
      %p87 = por %p85, %p86
      %p88 = scmp.ne.s32.totalorder %s74, %s75
      %p89 = scmp.eq.s32.totalorder %s29, 7
      %p90 = por %p88, %p89
      %p92 = scmp.ne.s32.totalorder %s75, %s91
      %p93 = scmp.eq.s32.totalorder %s29, 0
      %p94 = por %p92, %p93
      %s95 = ssub.s32 %s30, %s42
      %p96 = scmp.eq.s32.totalorder %s95, 0
      %s98 = sadd.s32 %s97, 1
      %s99 = scalar_select %p96, %s97, %s98
      %p102 = pneg %p96
      %p103 = scmp.eq.s32.totalorder %s23, 7
      %p104 = por %p102, %p103
      %p105 = scmp.ne.s32.totalorder %s97, %s100
      %p106 = scmp.eq.s32.totalorder %s23, 0
      %p107 = por %p105, %p106
      %p108 = scmp.ne.s32.totalorder %s97, %s100
      %p109 = scmp.eq.s32.totalorder %s28, 7
      %p110 = por %p108, %p109
      %p111 = scmp.ne.s32.totalorder %s100, %s101
      %p112 = scmp.eq.s32.totalorder %s28, 0
      %p113 = por %p111, %p112
      %p114 = scmp.ne.s32.totalorder %s100, %s101
      %p115 = scmp.eq.s32.totalorder %s29, 7
      %p116 = por %p114, %p115
      %p118 = scmp.ne.s32.totalorder %s101, %s117
      %p119 = scmp.eq.s32.totalorder %s29, 0
      %p120 = por %p118, %p119
      %s121 = ssub.s32 %s30, %s42
      %p122 = scmp.eq.s32.totalorder %s121, 0
      %s124 = sadd.s32 %s123, 1
      %s125 = scalar_select %p122, %s123, %s124
      %p128 = pneg %p122
      %p129 = scmp.eq.s32.totalorder %s23, 7
      %p130 = por %p128, %p129
      %p131 = scmp.ne.s32.totalorder %s123, %s126
      %p132 = scmp.eq.s32.totalorder %s23, 0
      %p133 = por %p131, %p132
      %p134 = scmp.ne.s32.totalorder %s123, %s126
      %p135 = scmp.eq.s32.totalorder %s28, 7
      %p136 = por %p134, %p135
      %p137 = scmp.ne.s32.totalorder %s126, %s127
      %p138 = scmp.eq.s32.totalorder %s28, 0
      %p139 = por %p137, %p138
      %p140 = scmp.ne.s32.totalorder %s126, %s127
      %p141 = scmp.eq.s32.totalorder %s29, 7
      %p142 = por %p140, %p141
      %p144 = scmp.ne.s32.totalorder %s127, %s143
      %p145 = scmp.eq.s32.totalorder %s29, 0
      %p146 = por %p144, %p145
      %s147 = ssub.s32 %s31, %s38
      %p148 = scmp.eq.s32.totalorder %s147, 0
      %s150 = sadd.s32 %s149, 1
      %s151 = scalar_select %p148, %s149, %s150
      %p154 = pneg %p148
      %p155 = scmp.eq.s32.totalorder %s23, 7
      %p156 = por %p154, %p155
      %p157 = scmp.ne.s32.totalorder %s149, %s152
      %p158 = scmp.eq.s32.totalorder %s23, 0
      %p159 = por %p157, %p158
      %p160 = scmp.ne.s32.totalorder %s149, %s152
      %p161 = scmp.eq.s32.totalorder %s28, 7
      %p162 = por %p160, %p161
      %p163 = scmp.ne.s32.totalorder %s152, %s153
      %p164 = scmp.eq.s32.totalorder %s28, 0
      %p165 = por %p163, %p164
      %p166 = scmp.ne.s32.totalorder %s152, %s153
      %p167 = scmp.eq.s32.totalorder %s29, 7
      %p168 = por %p166, %p167
      %p170 = scmp.ne.s32.totalorder %s153, %s169
      %p171 = scmp.eq.s32.totalorder %s29, 0
      %p172 = por %p170, %p171
      %s173 = ssub.s32 %s31, %s38
      %p174 = scmp.eq.s32.totalorder %s173, 0
      %s176 = sadd.s32 %s175, 1
      %s177 = scalar_select %p174, %s175, %s176
      %p180 = pneg %p174
      %p181 = scmp.eq.s32.totalorder %s23, 7
      %p182 = por %p180, %p181
      %p183 = scmp.ne.s32.totalorder %s175, %s178
      %p184 = scmp.eq.s32.totalorder %s23, 0
      %p185 = por %p183, %p184
      %p186 = scmp.ne.s32.totalorder %s175, %s178
      %p187 = scmp.eq.s32.totalorder %s28, 7
      %p188 = por %p186, %p187
      %p189 = scmp.ne.s32.totalorder %s178, %s179
      %p190 = scmp.eq.s32.totalorder %s28, 0
      %p191 = por %p189, %p190
      %p192 = scmp.ne.s32.totalorder %s178, %s179
      %p193 = scmp.eq.s32.totalorder %s29, 7
      %p194 = por %p192, %p193
      %p196 = scmp.ne.s32.totalorder %s179, %s195
      %p197 = scmp.eq.s32.totalorder %s29, 0
      %p198 = por %p196, %p197
      %s199 = ssub.s32 %s31, %s38
      %p200 = scmp.eq.s32.totalorder %s199, 0
      %s202 = sadd.s32 %s201, 1
      %s203 = scalar_select %p200, %s201, %s202
      %p206 = pneg %p200
      %p207 = scmp.eq.s32.totalorder %s23, 7
      %p208 = por %p206, %p207
      %p209 = scmp.ne.s32.totalorder %s201, %s204
      %p210 = scmp.eq.s32.totalorder %s23, 0
      %p211 = por %p209, %p210
      %p212 = scmp.ne.s32.totalorder %s201, %s204
      %p213 = scmp.eq.s32.totalorder %s28, 7
      %p214 = por %p212, %p213
      %p215 = scmp.ne.s32.totalorder %s204, %s205
      %p216 = scmp.eq.s32.totalorder %s28, 0
      %p217 = por %p215, %p216
      %p218 = scmp.ne.s32.totalorder %s204, %s205
      %p219 = scmp.eq.s32.totalorder %s29, 7
      %p220 = por %p218, %p219
      %p222 = scmp.ne.s32.totalorder %s205, %s221
      %p223 = scmp.eq.s32.totalorder %s29, 0
      %p224 = por %p222, %p223
      %s225 = ssub.s32 %s31, %s38
      %p226 = scmp.eq.s32.totalorder %s225, 0
      %s228 = sadd.s32 %s227, 1
      %s229 = scalar_select %p226, %s227, %s228
      %p232 = pneg %p226
      %p233 = scmp.eq.s32.totalorder %s23, 7
      %p234 = por %p232, %p233
      %p235 = scmp.ne.s32.totalorder %s227, %s230
      %p236 = scmp.eq.s32.totalorder %s23, 0
      %p237 = por %p235, %p236
      %p238 = scmp.ne.s32.totalorder %s227, %s230
      %p239 = scmp.eq.s32.totalorder %s28, 7
      %p240 = por %p238, %p239
      %p241 = scmp.ne.s32.totalorder %s230, %s231
      %p242 = scmp.eq.s32.totalorder %s28, 0
      %p243 = por %p241, %p242
      %p244 = scmp.ne.s32.totalorder %s230, %s231
      %p245 = scmp.eq.s32.totalorder %s29, 7
      %p246 = por %p244, %p245
      %p248 = scmp.ne.s32.totalorder %s231, %s247
      %p249 = scmp.eq.s32.totalorder %s29, 0
      %p250 = por %p248, %p249
      %s251 = ssub.s32 %s31, %s38
      %p252 = scmp.eq.s32.totalorder %s251, 0
      %s254 = sadd.s32 %s253, 1
      %s255 = scalar_select %p252, %s253, %s254
      %p258 = pneg %p252
      %p259 = scmp.eq.s32.totalorder %s23, 7
      %p260 = por %p258, %p259
      %p261 = scmp.ne.s32.totalorder %s253, %s256
      %p262 = scmp.eq.s32.totalorder %s23, 0
      %p263 = por %p261, %p262
      %p264 = scmp.ne.s32.totalorder %s253, %s256
      %p265 = scmp.eq.s32.totalorder %s28, 7
      %p266 = por %p264, %p265
      %p267 = scmp.ne.s32.totalorder %s256, %s257
      %p268 = scmp.eq.s32.totalorder %s28, 0
      %p269 = por %p267, %p268
      %p270 = scmp.ne.s32.totalorder %s256, %s257
      %p271 = scmp.eq.s32.totalorder %s29, 7
      %p272 = por %p270, %p271
      %p274 = scmp.ne.s32.totalorder %s257, %s273
      %p275 = scmp.eq.s32.totalorder %s29, 0
      %p276 = por %p274, %p275
      %s277 = ssub.s32 %s31, %s38
      %p278 = scmp.eq.s32.totalorder %s277, 0
      %s280 = sadd.s32 %s279, 1
      %s281 = scalar_select %p278, %s279, %s280
      %p284 = pneg %p278
      %p285 = scmp.eq.s32.totalorder %s23, 7
      %p286 = por %p284, %p285
      %p287 = scmp.ne.s32.totalorder %s279, %s282
      %p288 = scmp.eq.s32.totalorder %s23, 0
      %p289 = por %p287, %p288
      %p290 = scmp.ne.s32.totalorder %s279, %s282
      %p291 = scmp.eq.s32.totalorder %s28, 7
      %p292 = por %p290, %p291
      %p293 = scmp.ne.s32.totalorder %s282, %s283
      %p294 = scmp.eq.s32.totalorder %s28, 0
      %p295 = por %p293, %p294
      %p296 = scmp.ne.s32.totalorder %s282, %s283
      %p297 = scmp.eq.s32.totalorder %s29, 7
      %p298 = por %p296, %p297
      %p300 = scmp.ne.s32.totalorder %s283, %s299
      %p301 = scmp.eq.s32.totalorder %s29, 0
      %p302 = por %p300, %p301
      %s303 = ssub.s32 %s31, %s38
      %p304 = scmp.eq.s32.totalorder %s303, 0
      %s306 = sadd.s32 %s305, 1
      %s307 = scalar_select %p304, %s305, %s306
      %p310 = pneg %p304
      %p311 = scmp.eq.s32.totalorder %s23, 7
      %p312 = por %p310, %p311
      %p313 = scmp.ne.s32.totalorder %s305, %s308
      %p314 = scmp.eq.s32.totalorder %s23, 0
      %p315 = por %p313, %p314
      %p316 = scmp.ne.s32.totalorder %s305, %s308
      %p317 = scmp.eq.s32.totalorder %s28, 7
      %p318 = por %p316, %p317
      %p319 = scmp.ne.s32.totalorder %s308, %s309
      %p320 = scmp.eq.s32.totalorder %s28, 0
      %p321 = por %p319, %p320
      %p322 = scmp.ne.s32.totalorder %s308, %s309
      %p323 = scmp.eq.s32.totalorder %s29, 7
      %p324 = por %p322, %p323
      %p326 = scmp.ne.s32.totalorder %s309, %s325
      %p327 = scmp.eq.s32.totalorder %s29, 0
      %p328 = por %p326, %p327
      %s330 = sadd.s32 %s329, 1
      %p333 = scmp.eq.s32.totalorder %s23, 7
      %p334 = scmp.ne.s32.totalorder %s329, %s331
      %p335 = scmp.eq.s32.totalorder %s23, 0
      %p336 = por %p334, %p335
      %p337 = scmp.ne.s32.totalorder %s329, %s331
      %p338 = scmp.eq.s32.totalorder %s28, 7
      %p339 = por %p337, %p338
      %p340 = scmp.ne.s32.totalorder %s331, %s332
      %p341 = scmp.eq.s32.totalorder %s28, 0
      %p342 = por %p340, %p341
      %p343 = scmp.ne.s32.totalorder %s331, %s332
      %p344 = scmp.eq.s32.totalorder %s29, 7
      %p345 = por %p343, %p344
      %p347 = scmp.ne.s32.totalorder %s332, %s346
      %p348 = scmp.eq.s32.totalorder %s29, 0
      %p349 = por %p347, %p348
      %s351 = sadd.s32 %s350, 1
      %p354 = scmp.eq.s32.totalorder %s23, 7
      %p355 = scmp.ne.s32.totalorder %s350, %s352
      %p356 = scmp.eq.s32.totalorder %s23, 0
      %p357 = por %p355, %p356
      %p358 = scmp.ne.s32.totalorder %s350, %s352
      %p359 = scmp.eq.s32.totalorder %s28, 7
      %p360 = por %p358, %p359
      %p361 = scmp.ne.s32.totalorder %s352, %s353
      %p362 = scmp.eq.s32.totalorder %s28, 0
      %p363 = por %p361, %p362
      %p364 = scmp.ne.s32.totalorder %s352, %s353
      %p365 = scmp.eq.s32.totalorder %s29, 7
      %p366 = por %p364, %p365
      %p368 = scmp.ne.s32.totalorder %s353, %s367
      %p369 = scmp.eq.s32.totalorder %s29, 0
      %p370 = por %p368, %p369
      %s372 = sadd.s32 %s371, 1
      %p375 = scmp.eq.s32.totalorder %s23, 7
      %p376 = scmp.ne.s32.totalorder %s371, %s373
      %p377 = scmp.eq.s32.totalorder %s23, 0
      %p378 = por %p376, %p377
      %p379 = scmp.ne.s32.totalorder %s371, %s373
      %p380 = scmp.eq.s32.totalorder %s28, 7
      %p381 = por %p379, %p380
      %p382 = scmp.ne.s32.totalorder %s373, %s374
      %p383 = scmp.eq.s32.totalorder %s28, 0
      %p384 = por %p382, %p383
      %p385 = scmp.ne.s32.totalorder %s373, %s374
      %p386 = scmp.eq.s32.totalorder %s29, 7
      %p387 = por %p385, %p386
      %p389 = scmp.ne.s32.totalorder %s374, %s388
      %p390 = scmp.eq.s32.totalorder %s29, 0
      %p391 = por %p389, %p390
      %s392 = ssub.s32 %s30, %s42
      %p393 = scmp.eq.s32.totalorder %s392, 0
      %s395 = sadd.s32 %s394, 1
      %s396 = scalar_select %p393, %s394, %s395
      %p399 = pneg %p393
      %p400 = scmp.eq.s32.totalorder %s23, 7
      %p401 = por %p399, %p400
      %p402 = scmp.ne.s32.totalorder %s394, %s397
      %p403 = scmp.eq.s32.totalorder %s23, 0
      %p404 = por %p402, %p403
      %p405 = scmp.ne.s32.totalorder %s394, %s397
      %p406 = scmp.eq.s32.totalorder %s28, 7
      %p407 = por %p405, %p406
      %p408 = scmp.ne.s32.totalorder %s397, %s398
      %p409 = scmp.eq.s32.totalorder %s28, 0
      %p410 = por %p408, %p409
      %p411 = scmp.ne.s32.totalorder %s397, %s398
      %p412 = scmp.eq.s32.totalorder %s29, 7
      %p413 = por %p411, %p412
      %p415 = scmp.ne.s32.totalorder %s398, %s414
      %p416 = scmp.eq.s32.totalorder %s29, 0
      %p417 = por %p415, %p416
      %p418 = scmp.le.s32.totalorder 1, %s23
      %p419 = scmp.lt.s32.totalorder %s23, 9
      %p420 = pnand %p418, %p419
      %p421 = pneg %p420
      // Predicated region
      $region9: #{tpu_custom_call.1} parent=5 // pred_check
        _
      $region10: #{tpu_custom_call.1} parent=5 // pred_check_branch
        %423 = sbr.rel (%p420) target = $region12
      $region11: #{tpu_custom_call.1} parent=5 // pred_region
        %s424 = ssub.s32 %s23, 1
        // Predicated region
        $region13: #{tpu_custom_call.1} parent=11 // pred_check
          %p425 = pneg %p342
        $region14: #{tpu_custom_call.1} parent=11 // pred_check_branch
          %427 = sbr.rel (%p425) target = $region16
        $region15: #{tpu_custom_call.1} parent=11 // pred_region
          _
        $region16: #{tpu_custom_call.1} parent=11 // pred_fallthru
          _
        // Predicated region
        $region17: #{tpu_custom_call.1} parent=11 // pred_check
          %p428 = pneg %p363
        $region18: #{tpu_custom_call.1} parent=11 // pred_check_branch
          %430 = sbr.rel (%p428) target = $region20
        $region19: #{tpu_custom_call.1} parent=11 // pred_region
          _
        $region20: #{tpu_custom_call.1} parent=11 // pred_fallthru
          _
        // Predicated region
        $region21: #{tpu_custom_call.1} parent=11 // pred_check
          %p431 = pneg %p384
        $region22: #{tpu_custom_call.1} parent=11 // pred_check_branch
          %433 = sbr.rel (%p431) target = $region24
        $region23: #{tpu_custom_call.1} parent=11 // pred_region
          _
        $region24: #{tpu_custom_call.1} parent=11 // pred_fallthru
          _
      $region12: #{tpu_custom_call.1} parent=5 // pred_fallthru
        _
      %p434 = scmp.lt.s32.totalorder %s23, 8
      // Predicated region
      $region25: #{tpu_custom_call.1} parent=5 // pred_check
        %p435 = pneg %p434
      $region26: #{tpu_custom_call.1} parent=5 // pred_check_branch
        %437 = sbr.rel (%p435) target = $region28
      $region27: #{tpu_custom_call.1} parent=5 // pred_region
        // Predicated region
        $region29: #{tpu_custom_call.1} parent=27 // pred_check
          %p438 = pneg %p55
        $region30: #{tpu_custom_call.1} parent=27 // pred_check_branch
          %440 = sbr.rel (%p438) target = $region32
        $region31: #{tpu_custom_call.1} parent=27 // pred_region
          %p441 = scmp.lt.s32.totalorder %s30, 1
          %s442 = scalar_select %p441, %s30, 1
          %s443 = smul.addr %s442, 8
          %s444 = scalar_lea.vmem %s0, %s443
        $region32: #{tpu_custom_call.1} parent=27 // pred_fallthru
          _
        // Predicated region
        $region33: #{tpu_custom_call.1} parent=27 // pred_check
          %p445 = pneg %p81
        $region34: #{tpu_custom_call.1} parent=27 // pred_check_branch
          %447 = sbr.rel (%p445) target = $region36
        $region35: #{tpu_custom_call.1} parent=27 // pred_region
          %p448 = scmp.lt.s32.totalorder %s30, 1
          %s449 = scalar_select %p448, %s30, 1
          %s450 = smul.addr %s449, 2
          %s451 = smul.addr %s450, 8
          %s452 = scalar_lea.vmem %s1, %s451
        $region36: #{tpu_custom_call.1} parent=27 // pred_fallthru
          _
        // Predicated region
        $region37: #{tpu_custom_call.1} parent=27 // pred_check
          %p453 = pneg %p107
        $region38: #{tpu_custom_call.1} parent=27 // pred_check_branch
          %455 = sbr.rel (%p453) target = $region40
        $region39: #{tpu_custom_call.1} parent=27 // pred_region
          %p456 = scmp.lt.s32.totalorder %s30, 1
          %s457 = scalar_select %p456, %s30, 1
          %s458 = smul.addr %s457, 2
          %s459 = smul.addr %s458, 8
          %s460 = scalar_lea.vmem %s2, %s459
        $region40: #{tpu_custom_call.1} parent=27 // pred_fallthru
          _
        // Predicated region
        $region41: #{tpu_custom_call.1} parent=27 // pred_check
          %p461 = pneg %p133
        $region42: #{tpu_custom_call.1} parent=27 // pred_check_branch
          %463 = sbr.rel (%p461) target = $region44
        $region43: #{tpu_custom_call.1} parent=27 // pred_region
          %p464 = scmp.lt.s32.totalorder %s30, 1
          %s465 = scalar_select %p464, %s30, 1
          %s466 = smul.addr %s465, 8
          %s467 = scalar_lea.vmem %s3, %s466
        $region44: #{tpu_custom_call.1} parent=27 // pred_fallthru
          _
        // Predicated region
        $region45: #{tpu_custom_call.1} parent=27 // pred_check
          %p468 = pneg %p159
        $region46: #{tpu_custom_call.1} parent=27 // pred_check_branch
          %470 = sbr.rel (%p468) target = $region48
        $region47: #{tpu_custom_call.1} parent=27 // pred_region
          %p471 = scmp.lt.s32.totalorder %s31, 3
          %s472 = scalar_select %p471, %s31, 3
          %s473 = smul.addr %s472, 16
          %s474 = smul.addr %s473, 8
          %s475 = scalar_lea.vmem %s4, %s474
        $region48: #{tpu_custom_call.1} parent=27 // pred_fallthru
          _
        // Predicated region
        $region49: #{tpu_custom_call.1} parent=27 // pred_check
          %p476 = pneg %p185
        $region50: #{tpu_custom_call.1} parent=27 // pred_check_branch
          %478 = sbr.rel (%p476) target = $region52
        $region51: #{tpu_custom_call.1} parent=27 // pred_region
          %p479 = scmp.lt.s32.totalorder %s31, 3
          %s480 = scalar_select %p479, %s31, 3
          %s481 = scalar_lea.vmem %s5, %s480
        $region52: #{tpu_custom_call.1} parent=27 // pred_fallthru
          _
        // Predicated region
        $region53: #{tpu_custom_call.1} parent=27 // pred_check
          %p482 = pneg %p211
        $region54: #{tpu_custom_call.1} parent=27 // pred_check_branch
          %484 = sbr.rel (%p482) target = $region56
        $region55: #{tpu_custom_call.1} parent=27 // pred_region
          %p485 = scmp.lt.s32.totalorder %s31, 3
          %s486 = scalar_select %p485, %s31, 3
          %s487 = smul.addr %s486, 16
          %s488 = smul.addr %s487, 8
          %s489 = scalar_lea.vmem %s6, %s488
        $region56: #{tpu_custom_call.1} parent=27 // pred_fallthru
          _
        // Predicated region
        $region57: #{tpu_custom_call.1} parent=27 // pred_check
          %p490 = pneg %p237
        $region58: #{tpu_custom_call.1} parent=27 // pred_check_branch
          %492 = sbr.rel (%p490) target = $region60
        $region59: #{tpu_custom_call.1} parent=27 // pred_region
          %p493 = scmp.lt.s32.totalorder %s31, 3
          %s494 = scalar_select %p493, %s31, 3
          %s495 = scalar_lea.vmem %s7, %s494
        $region60: #{tpu_custom_call.1} parent=27 // pred_fallthru
          _
        // Predicated region
        $region61: #{tpu_custom_call.1} parent=27 // pred_check
          %p496 = pneg %p263
        $region62: #{tpu_custom_call.1} parent=27 // pred_check_branch
          %498 = sbr.rel (%p496) target = $region64
        $region63: #{tpu_custom_call.1} parent=27 // pred_region
          %p499 = scmp.lt.s32.totalorder %s31, 3
          %s500 = scalar_select %p499, %s31, 3
          %s501 = smul.addr %s500, 16
          %s502 = smul.addr %s501, 8
          %s503 = scalar_lea.vmem %s8, %s502
        $region64: #{tpu_custom_call.1} parent=27 // pred_fallthru
          _
        // Predicated region
        $region65: #{tpu_custom_call.1} parent=27 // pred_check
          %p504 = pneg %p289
        $region66: #{tpu_custom_call.1} parent=27 // pred_check_branch
          %506 = sbr.rel (%p504) target = $region68
        $region67: #{tpu_custom_call.1} parent=27 // pred_region
          %p507 = scmp.lt.s32.totalorder %s31, 3
          %s508 = scalar_select %p507, %s31, 3
          %s509 = scalar_lea.vmem %s9, %s508
        $region68: #{tpu_custom_call.1} parent=27 // pred_fallthru
          _
        // Predicated region
        $region69: #{tpu_custom_call.1} parent=27 // pred_check
          %p510 = pneg %p315
        $region70: #{tpu_custom_call.1} parent=27 // pred_check_branch
          %512 = sbr.rel (%p510) target = $region72
        $region71: #{tpu_custom_call.1} parent=27 // pred_region
          %p513 = scmp.lt.s32.totalorder %s31, 3
          %s514 = scalar_select %p513, %s31, 3
          %s515 = smul.addr %s514, 4
          %s516 = smul.addr %s515, 8
          %s517 = scalar_lea.vmem %s10, %s516
        $region72: #{tpu_custom_call.1} parent=27 // pred_fallthru
          _
      $region28: #{tpu_custom_call.1} parent=5 // pred_fallthru
        _
      %p518 = scmp.le.s32.totalorder 1, %s23
      %p519 = scmp.lt.s32.totalorder %s23, 9
      %p520 = pnand %p518, %p519
      %p521 = pneg %p520
      // Predicated region
      $region73: #{tpu_custom_call.1} parent=5 // pred_check
        _
      $region74: #{tpu_custom_call.1} parent=5 // pred_check_branch
        %523 = sbr.rel (%p520) target = $region76
      $region75: #{tpu_custom_call.1} parent=5 // pred_region
        %s524 = ssub.s32 %s23, 1
        %p525 = scmp.lt.s32.totalorder %s32, 1
        %s526 = scalar_select %p525, %s32, 1
        %s527 = smul.addr %s526, 8
        %s528 = scalar_lea.vmem %s0, %s527
        %p529 = pneg %p61
        %p530 = pneg %p58
        %p531 = scmp.lt.s32.totalorder %s32, 1
        %s532 = scalar_select %p531, %s32, 1
        %s533 = smul.addr %s532, 2
        %s534 = smul.addr %s533, 8
        %s535 = scalar_lea.vmem %s1, %s534
        %p536 = pneg %p87
        %p537 = pneg %p84
        %p538 = scmp.lt.s32.totalorder %s32, 1
        %s539 = scalar_select %p538, %s32, 1
        %s540 = smul.addr %s539, 2
        %s541 = smul.addr %s540, 8
        %s542 = scalar_lea.vmem %s2, %s541
        %p543 = pneg %p113
        %p544 = pneg %p110
        %p545 = scmp.lt.s32.totalorder %s32, 1
        %s546 = scalar_select %p545, %s32, 1
        %s547 = smul.addr %s546, 8
        %s548 = scalar_lea.vmem %s3, %s547
        %p549 = pneg %p139
        %p550 = pneg %p136
        %p551 = scmp.lt.s32.totalorder %s33, 3
        %s552 = scalar_select %p551, %s33, 3
        %s553 = smul.addr %s552, 16
        %s554 = smul.addr %s553, 8
        %s555 = scalar_lea.vmem %s4, %s554
        %p556 = pneg %p165
        %p557 = pneg %p162
        %p558 = scmp.lt.s32.totalorder %s33, 3
        %s559 = scalar_select %p558, %s33, 3
        %s560 = scalar_lea.vmem %s5, %s559
        %p561 = pneg %p191
        %p562 = pneg %p188
        %p563 = scmp.lt.s32.totalorder %s33, 3
        %s564 = scalar_select %p563, %s33, 3
        %s565 = smul.addr %s564, 16
        %s566 = smul.addr %s565, 8
        %s567 = scalar_lea.vmem %s6, %s566
        %p568 = pneg %p217
        %p569 = pneg %p214
        %p570 = scmp.lt.s32.totalorder %s33, 3
        %s571 = scalar_select %p570, %s33, 3
        %s572 = scalar_lea.vmem %s7, %s571
        %p573 = pneg %p243
        %p574 = pneg %p240
        %p575 = scmp.lt.s32.totalorder %s33, 3
        %s576 = scalar_select %p575, %s33, 3
        %s577 = smul.addr %s576, 16
        %s578 = smul.addr %s577, 8
        %s579 = scalar_lea.vmem %s8, %s578
        %p580 = pneg %p269
        %p581 = pneg %p266
        %p582 = scmp.lt.s32.totalorder %s33, 3
        %s583 = scalar_select %p582, %s33, 3
        %s584 = scalar_lea.vmem %s9, %s583
        %p585 = pneg %p295
        %p586 = pneg %p292
        %p587 = scmp.lt.s32.totalorder %s33, 3
        %s588 = scalar_select %p587, %s33, 3
        %s589 = smul.addr %s588, 4
        %s590 = smul.addr %s589, 8
        %s591 = scalar_lea.vmem %s10, %s590
        %p592 = pneg %p321
        %p593 = pneg %p318
        %p594 = pneg %p342
        %p595 = pneg %p339
        %p596 = pneg %p363
        %p597 = pneg %p360
        %p598 = pneg %p384
        %p599 = pneg %p381
        %p600 = pneg %p410
        %p601 = pneg %p407
        %s602 = sand.u32 %s397, 1
        %s603 = scalar_lea.sflag [#allocation4], %s602
        %s604 = sand.u32 %s397, 1
        %s605 = smul.addr %s604, 8
        %s606 = scalar_lea.vmem [#allocation3], %s605
        %p607 = scmp.lt.s32.totalorder %s32, 1
        %s608 = scalar_select %p607, %s32, 1
        %s609 = smul.addr %s608, 8
        %s610 = scalar_lea.vmem %s0, %s609
        %p611 = scmp.lt.s32.totalorder %s32, 1
        %s612 = scalar_select %p611, %s32, 1
        %s613 = smul.addr %s612, 2
        %s614 = smul.addr %s613, 8
        %s615 = scalar_lea.vmem %s1, %s614
        %p616 = scmp.lt.s32.totalorder %s32, 1
        %s617 = scalar_select %p616, %s32, 1
        %s618 = smul.addr %s617, 2
        %s619 = smul.addr %s618, 8
        %s620 = scalar_lea.vmem %s2, %s619
        %p621 = scmp.lt.s32.totalorder %s32, 1
        %s622 = scalar_select %p621, %s32, 1
        %s623 = smul.addr %s622, 8
        %s624 = scalar_lea.vmem %s3, %s623
        %p625 = scmp.lt.s32.totalorder %s33, 3
        %s626 = scalar_select %p625, %s33, 3
        %s627 = smul.addr %s626, 16
        %s628 = smul.addr %s627, 8
        %s629 = scalar_lea.vmem %s4, %s628
        %p630 = scmp.lt.s32.totalorder %s33, 3
        %s631 = scalar_select %p630, %s33, 3
        %s632 = scalar_lea.vmem %s5, %s631
        %p633 = scmp.lt.s32.totalorder %s33, 3
        %s634 = scalar_select %p633, %s33, 3
        %s635 = smul.addr %s634, 16
        %s636 = smul.addr %s635, 8
        %s637 = scalar_lea.vmem %s6, %s636
        %p638 = scmp.lt.s32.totalorder %s33, 3
        %s639 = scalar_select %p638, %s33, 3
        %s640 = scalar_lea.vmem %s7, %s639
        %p641 = scmp.lt.s32.totalorder %s33, 3
        %s642 = scalar_select %p641, %s33, 3
        %s643 = smul.addr %s642, 16
        %s644 = smul.addr %s643, 8
        %s645 = scalar_lea.vmem %s8, %s644
        %p646 = scmp.lt.s32.totalorder %s33, 3
        %s647 = scalar_select %p646, %s33, 3
        %s648 = scalar_lea.vmem %s9, %s647
        %p649 = scmp.lt.s32.totalorder %s33, 3
        %s650 = scalar_select %p649, %s33, 3
        %s651 = smul.addr %s650, 4
        %s652 = smul.addr %s651, 8
        %s653 = scalar_lea.vmem %s10, %s652
        %p654 = scmp.eq.s32.totalorder %s33, 0
        // Predicated region
        $region77: #{tpu_custom_call.1} parent=75 // pred_check
          %p655 = pneg %p654
        $region78: #{tpu_custom_call.1} parent=75 // pred_check_branch
          %657 = sbr.rel (%p655) target = $region80
        $region79: #{tpu_custom_call.1} parent=75 // pred_region
          %658 = vst [vmem:[#allocation2] sm:$0xff] 0.0
        $region80: #{tpu_custom_call.1} parent=75 // pred_fallthru
          _
        %v659 = vld [vmem:[%s610] sm:$0xff]
        %v660 = vld [vmem:[%s615] sm:$0xff]
        %v661 = vld [vmem:[%s615 + $0x8] sm:$0xff]
        %v662 = vld [vmem:[%s620] sm:$0xff]
        %v663 = vld [vmem:[%s620 + $0x8] sm:$0xff]
        %v664 = vld [vmem:[%s629] sm:$0xff]
        %v665 = vld [vmem:[%s629 + $0x8] sm:$0xff]
        %v666 = vld [vmem:[%s629 + $0x10] sm:$0xff]
        %v667 = vld [vmem:[%s629 + $0x18] sm:$0xff]
        %v668 = vld [vmem:[%s629 + $0x20] sm:$0xff]
        %v669 = vld [vmem:[%s629 + $0x28] sm:$0xff]
        %v670 = vld [vmem:[%s629 + $0x30] sm:$0xff]
        %v671 = vld [vmem:[%s629 + $0x38] sm:$0xff]
        %v672 = vld [vmem:[%s629 + $0x40] sm:$0xff]
        %v673 = vld [vmem:[%s629 + $0x48] sm:$0xff]
        %v674 = vld [vmem:[%s629 + $0x50] sm:$0xff]
        %v675 = vld [vmem:[%s629 + $0x58] sm:$0xff]
        %v676 = vld [vmem:[%s629 + $0x60] sm:$0xff]
        %v677 = vld [vmem:[%s629 + $0x68] sm:$0xff]
        %v678 = vld [vmem:[%s629 + $0x70] sm:$0xff]
        %v679 = vld [vmem:[%s629 + $0x78] sm:$0xff]
        %v680 = vld [vmem:[%s632] sm:$0x1]
        %v682 = vperm.slane %v680, 0
        %684 = vmatpush.msra.mxu0 %v679
        %685 = vmatpush.msra.mxu0 %v678
        %686 = vmatpush.msra.mxu0 %v677
        %687 = vmatpush.msra.mxu0 %v676
        %688 = vmatpush.msra.mxu0 %v675
        %689 = vmatpush.msra.mxu0 %v674
        %690 = vmatpush.msra.mxu0 %v673
        %691 = vmatpush.msra.mxu0 %v672
        %692 = vmatpush.msra.mxu0 %v671
        %693 = vmatpush.msra.mxu0 %v670
        %694 = vmatpush.msra.mxu0 %v669
        %695 = vmatpush.msra.mxu0 %v668
        %696 = vmatpush.msra.mxu0 %v667
        %697 = vmatpush.msra.mxu0 %v666
        %698 = vmatpush.msra.mxu0 %v665
        %699 = vmatpush.msra.mxu0 %v664
        %700 = vmatmul.f32.gmra.mxu0 %v659
        %v701 = vpop.f32.mrf.mxu0
        %v702 = vadd.f32 %v682, %v701
        %703 = vdwg.mxu0
        %v704 = vld [vmem:[%s637] sm:$0xff]
        %v705 = vld [vmem:[%s637 + $0x8] sm:$0xff]
        %v706 = vld [vmem:[%s637 + $0x10] sm:$0xff]
        %v707 = vld [vmem:[%s637 + $0x18] sm:$0xff]
        %v708 = vld [vmem:[%s637 + $0x20] sm:$0xff]
        %v709 = vld [vmem:[%s637 + $0x28] sm:$0xff]
        %v710 = vld [vmem:[%s637 + $0x30] sm:$0xff]
        %v711 = vld [vmem:[%s637 + $0x38] sm:$0xff]
        %v712 = vld [vmem:[%s637 + $0x40] sm:$0xff]
        %v713 = vld [vmem:[%s637 + $0x48] sm:$0xff]
        %v714 = vld [vmem:[%s637 + $0x50] sm:$0xff]
        %v715 = vld [vmem:[%s637 + $0x58] sm:$0xff]
        %v716 = vld [vmem:[%s637 + $0x60] sm:$0xff]
        %v717 = vld [vmem:[%s637 + $0x68] sm:$0xff]
        %v718 = vld [vmem:[%s637 + $0x70] sm:$0xff]
        %v719 = vld [vmem:[%s637 + $0x78] sm:$0xff]
        %v720 = vld [vmem:[%s640] sm:$0x1]
        %v722 = vperm.slane %v720, 0
        %724 = vmatpush.msra.mxu0 %v719
        %725 = vmatpush.msra.mxu0 %v718
        %726 = vmatpush.msra.mxu0 %v717
        %727 = vmatpush.msra.mxu0 %v716
        %728 = vmatpush.msra.mxu0 %v715
        %729 = vmatpush.msra.mxu0 %v714
        %730 = vmatpush.msra.mxu0 %v713
        %731 = vmatpush.msra.mxu0 %v712
        %732 = vmatpush.msra.mxu0 %v711
        %733 = vmatpush.msra.mxu0 %v710
        %734 = vmatpush.msra.mxu0 %v709
        %735 = vmatpush.msra.mxu0 %v708
        %736 = vmatpush.msra.mxu0 %v707
        %737 = vmatpush.msra.mxu0 %v706
        %738 = vmatpush.msra.mxu0 %v705
        %739 = vmatpush.msra.mxu0 %v704
        %740 = vmatmul.f32.gmra.mxu0 %v660
        %v741 = vpop.f32.mrf.mxu0
        %v742 = vadd.f32 %v722, %v741
        %743 = vmatmul.f32.gmra.mxu0 %v661
        %v744 = vpop.f32.mrf.mxu0
        %v745 = vadd.f32 %v722, %v744
        %746 = vdwg.mxu0
        %v747 = vld [vmem:[%s645] sm:$0xff]
        %v748 = vld [vmem:[%s645 + $0x8] sm:$0xff]
        %v749 = vld [vmem:[%s645 + $0x10] sm:$0xff]
        %v750 = vld [vmem:[%s645 + $0x18] sm:$0xff]
        %v751 = vld [vmem:[%s645 + $0x20] sm:$0xff]
        %v752 = vld [vmem:[%s645 + $0x28] sm:$0xff]
        %v753 = vld [vmem:[%s645 + $0x30] sm:$0xff]
        %v754 = vld [vmem:[%s645 + $0x38] sm:$0xff]
        %v755 = vld [vmem:[%s645 + $0x40] sm:$0xff]
        %v756 = vld [vmem:[%s645 + $0x48] sm:$0xff]
        %v757 = vld [vmem:[%s645 + $0x50] sm:$0xff]
        %v758 = vld [vmem:[%s645 + $0x58] sm:$0xff]
        %v759 = vld [vmem:[%s645 + $0x60] sm:$0xff]
        %v760 = vld [vmem:[%s645 + $0x68] sm:$0xff]
        %v761 = vld [vmem:[%s645 + $0x70] sm:$0xff]
        %v762 = vld [vmem:[%s645 + $0x78] sm:$0xff]
        %v763 = vld [vmem:[%s648] sm:$0x1]
        %v765 = vperm.slane %v763, 0
        %767 = vmatpush.msra.mxu0 %v762
        %768 = vmatpush.msra.mxu0 %v761
        %769 = vmatpush.msra.mxu0 %v760
        %770 = vmatpush.msra.mxu0 %v759
        %771 = vmatpush.msra.mxu0 %v758
        %772 = vmatpush.msra.mxu0 %v757
        %773 = vmatpush.msra.mxu0 %v756
        %774 = vmatpush.msra.mxu0 %v755
        %775 = vmatpush.msra.mxu0 %v754
        %776 = vmatpush.msra.mxu0 %v753
        %777 = vmatpush.msra.mxu0 %v752
        %778 = vmatpush.msra.mxu0 %v751
        %779 = vmatpush.msra.mxu0 %v750
        %780 = vmatpush.msra.mxu0 %v749
        %781 = vmatpush.msra.mxu0 %v748
        %782 = vmatpush.msra.mxu0 %v747
        %783 = vmatmul.f32.gmra.mxu0 %v662
        %v784 = vpop.f32.mrf.mxu0
        %v785 = vadd.f32 %v765, %v784
        %786 = vmatmul.f32.gmra.mxu0 %v663
        %v787 = vpop.f32.mrf.mxu0
        %v788 = vadd.f32 %v765, %v787
        %789 = vdwg.mxu0
        %v790 = vmul.f32 %v702, 0.17677669
        %vm791 = vcmask 261120
        %v793 = vsel %vm791, %v790, 0
        %v796 = vsel %vm791, %v742, 0
        %v799 = vsel %vm791, %v745, 0
        %801 = vmatpush.xpose.msra.mxu0 0.0
        %802 = vmatpush.xpose.msra.mxu0 0.0
        %803 = vmatpush.xpose.msra.mxu0 0.0
        %804 = vmatpush.xpose.msra.mxu0 0.0
        %805 = vmatpush.xpose.msra.mxu0 0.0
        %806 = vmatpush.xpose.msra.mxu0 0.0
        %807 = vmatpush.xpose.msra.mxu0 0.0
        %808 = vmatpush.xpose.msra.mxu0 0.0
        %809 = vmatpush.xpose.msra.mxu0 0.0
        %810 = vmatpush.xpose.msra.mxu0 0.0
        %811 = vmatpush.xpose.msra.mxu0 0.0
        %812 = vmatpush.xpose.msra.mxu0 0.0
        %813 = vmatpush.xpose.msra.mxu0 0.0
        %814 = vmatpush.xpose.msra.mxu0 0.0
        %815 = vmatpush.xpose.msra.mxu0 %v799
        %816 = vmatpush.xpose.msra.mxu0 %v796
        %817 = vmatmul.f32.gmra.mxu0 %v793
        %v818 = vpop.f32.mrf.mxu0
        %v819 = vadd.f32 0.0, %v818
        %820 = vdwg.mxu0
        %vm821 = vcmask 130048
        %v822 = vsel %vm821, %v819, -inf
        %823 = vmax.xlane.f32.xlu0 %v822
        %v824 = vpop.xlane.xlu0 %823
        %v825 = vsub.f32 %v819, %v824
        %v826 = vmul.f32 %v825, 1.442695
        %v827 = vpow.pop %v826
        %v828 = vsel %vm821, %v827, 0.0
        %829 = vadd.xlane.f32.xlu0 %v828
        %v830 = vpop.xlane.xlu0 %829
        %v831 = vrcp.pop %v830
        %v832 = vmul.f32 %v830, %v831
        %v833 = vsub.f32 1.0, %v832
        %v834 = vmul.f32 %v831, %v833
        %v835 = vadd.f32 %v831, %v834
        %vm836 = vweird.f32 %v830
        %vm837 = vweird.f32 %v831
        %vm838 = vmor %vm836, %vm837
        %v839 = vsel %vm838, %v831, %v835
        %v840 = vand.u32 2147483647, %v830
        %vm841 = vcmp.eq.f32.partialorder %v840, 8.507059e+37
        %v842 = vand.u32 %v830, 2147483648
        %v843 = vor.u32 1.1754944e-38, %v842
        %v844 = vsel %vm841, %v843, %v839
        %v845 = vmul.f32 %v827, %v844
        %v847 = vsel %vm821, %v845, 0
        %849 = vmatpush.msra.mxu0 0.0
        %850 = vmatpush.msra.mxu0 0.0
        %851 = vmatpush.msra.mxu0 0.0
        %852 = vmatpush.msra.mxu0 0.0
        %853 = vmatpush.msra.mxu0 0.0
        %854 = vmatpush.msra.mxu0 0.0
        %855 = vmatpush.msra.mxu0 0.0
        %856 = vmatpush.msra.mxu0 0.0
        %857 = vmatpush.msra.mxu0 0.0
        %858 = vmatpush.msra.mxu0 0.0
        %859 = vmatpush.msra.mxu0 0.0
        %860 = vmatpush.msra.mxu0 0.0
        %861 = vmatpush.msra.mxu0 0.0
        %862 = vmatpush.msra.mxu0 0.0
        %863 = vmatpush.msra.mxu0 %v788
        %864 = vmatpush.msra.mxu0 %v785
        %865 = vmatmul.f32.gmra.mxu0 %v847
        %v866 = vpop.f32.mrf.mxu0
        %v867 = vadd.f32 0.0, %v866
        %868 = vdwg.mxu0
        %v869 = vld [vmem:[#allocation2] sm:$0xff]
        %v870 = vld [vmem:[%s653] sm:$0xff]
        %v871 = vld [vmem:[%s653 + $0x8] sm:$0xff]
        %v872 = vld [vmem:[%s653 + $0x10] sm:$0xff]
        %v873 = vld [vmem:[%s653 + $0x18] sm:$0xff]
        %v875 = vsel %vm791, %v867, 0
        %877 = vmatpush.msra.mxu0 0.0
        %878 = vmatpush.msra.mxu0 0.0
        %879 = vmatpush.msra.mxu0 0.0
        %880 = vmatpush.msra.mxu0 0.0
        %881 = vmatpush.msra.mxu0 0.0
        %882 = vmatpush.msra.mxu0 0.0
        %883 = vmatpush.msra.mxu0 0.0
        %884 = vmatpush.msra.mxu0 0.0
        %885 = vmatpush.msra.mxu0 0.0
        %886 = vmatpush.msra.mxu0 0.0
        %887 = vmatpush.msra.mxu0 0.0
        %888 = vmatpush.msra.mxu0 0.0
        %889 = vmatpush.msra.mxu0 %v873
        %890 = vmatpush.msra.mxu0 %v872
        %891 = vmatpush.msra.mxu0 %v871
        %892 = vmatpush.msra.mxu0 %v870
        %893 = vmatmul.f32.gmra.mxu0 %v875
        %v894 = vpop.f32.mrf.mxu0
        %v895 = vadd.f32 0.0, %v894
        %896 = vdwg.mxu0
        %v897 = vadd.f32 %v869, %v895
        %898 = vst [vmem:[#allocation2] sm:$0xff] %v897
        %p899 = scmp.eq.s32.totalorder %s33, 3
        // Predicated region
        $region81: #{tpu_custom_call.1} parent=75 // pred_check
          %p900 = pneg %p899
        $region82: #{tpu_custom_call.1} parent=75 // pred_check_branch
          %902 = sbr.rel (%p900) target = $region84
        $region83: #{tpu_custom_call.1} parent=75 // pred_region
          %v903 = vld [vmem:[#allocation2] sm:$0xff]
          %v904 = vld [vmem:[%s11] sm:$0x1]
          %v906 = vperm.slane %v904, 0
          %v908 = vadd.f32 %v903, %v906
          %v909 = vld [vmem:[%s624] sm:$0xff]
          %v910 = vadd.f32 %v908, %v909
          %911 = vadd.xlane.f32.xlu0 %v910
          %v912 = vpop.xlane.xlu0 %911
          %v913 = vrcp.pop 128.0
          %v914 = vmul.f32 128.0, %v913
          %v915 = vsub.f32 1.0, %v914
          %v916 = vmul.f32 %v913, %v915
          %v917 = vadd.f32 %v913, %v916
          %vm918 = vweird.f32 %v913
          %v919 = vsel %vm918, %v913, %v917
          %v920 = vmul.f32 %v912, %v919
          %v921 = vsub.f32 %v910, %v920
          %v922 = vmul.f32 %v921, %v921
          %923 = vadd.xlane.f32.xlu0 %v922
          %v924 = vpop.xlane.xlu0 %923
          %v925 = vmul.f32 %v924, %v919
          %v926 = vadd.f32 %v925, 1e-05
          %v927 = vrsqrt.pop %v926
          %v928 = vmul.f32 %v927, %v926
          %v929 = vmul.f32 %v928, %v927
          %v930 = vmul.f32 0.5, %v929
          %v931 = vsub.f32 1.5, %v930
          %v932 = vmul.f32 %v927, %v931
          %vm933 = vweird.f32 %v926
          %vm934 = vweird.f32 %v927
          %vm935 = vmor %vm933, %vm934
          %v936 = vsel %vm935, %v927, %v932
          %v937 = vmul.f32 %v921, %v936
          %v938 = vld [vmem:[%s12] sm:$0x1]
          %v940 = vperm.slane %v938, 0
          %v942 = vmul.f32 %v937, %v940
          %v943 = vld [vmem:[%s13] sm:$0x1]
          %v945 = vperm.slane %v943, 0
          %v947 = vadd.f32 %v942, %v945
          %948 = vst [vmem:[%s606] sm:$0xff] %v947
        $region84: #{tpu_custom_call.1} parent=75 // pred_fallthru
          _
        %s949 = sand.u32 %s397, 1
        %s950 = scalar_lea.sflag [#allocation4], %s949
        %s951 = sand.u32 %s397, 1
        %s952 = smul.addr %s951, 8
        %s953 = scalar_lea.vmem [#allocation3], %s952
        // Predicated region
        $region85: #{tpu_custom_call.1} parent=75 // pred_check
          %p954 = pneg %p407
        $region86: #{tpu_custom_call.1} parent=75 // pred_check_branch
          %956 = sbr.rel (%p954) target = $region88
        $region87: #{tpu_custom_call.1} parent=75 // pred_region
          %958 = vsyncadd %s950, 0
          %s959 = smul.addr %s32, 8
          %s960 = scalar_lea.hbm %s14, %s959
          %s962 = sshll.u32 %s953, 4
          %s963 = int_to_ptr.vmem [resolvable:$true] %s962
          %s964 = sshll.u32 %s960, 4
          %s965 = int_to_ptr.hbm [resolvable:$true] %s964
          %967 = dma.vmem_to_hbm [thread:$0]  %s963, 128, %s965, %s950
        $region88: #{tpu_custom_call.1} parent=75 // pred_fallthru
          _
      $region76: #{tpu_custom_call.1} parent=5 // pred_fallthru
        _
      %p968 = scmp.le.s32.totalorder 2, %s23
      // Predicated region
      $region89: #{tpu_custom_call.1} parent=5 // pred_check
        %p969 = pneg %p968
      $region90: #{tpu_custom_call.1} parent=5 // pred_check_branch
        %971 = sbr.rel (%p969) target = $region92
      $region91: #{tpu_custom_call.1} parent=5 // pred_region
        %s972 = ssub.s32 %s23, 2
        // Predicated region
        $region93: #{tpu_custom_call.1} parent=91 // pred_check
          %p973 = pneg %p413
        $region94: #{tpu_custom_call.1} parent=91 // pred_check_branch
          %975 = sbr.rel (%p973) target = $region96
        $region95: #{tpu_custom_call.1} parent=91 // pred_region
          %s976 = sand.u32 %s398, 1
          %s977 = scalar_lea.sflag [#allocation4], %s976
          %s978 = sand.u32 %s398, 1
          %s979 = smul.addr %s978, 8
          %s980 = scalar_lea.vmem [#allocation3], %s979
          %982 = dma.done %s977, 128
        $region96: #{tpu_custom_call.1} parent=91 // pred_fallthru
          _
      $region92: #{tpu_custom_call.1} parent=5 // pred_fallthru
        _
    $region6: #{tpu_custom_call.1} parent=1 // loop_footer
      %s27 = sadd.s32 1, %s23
    $region7: #{tpu_custom_call.1} parent=1 // loop_footer_branch
      %22 = sbr.rel target = $region3
    $region8: #{tpu_custom_call.1} parent=1 // loop_exit
      _
    %983 = vsyncpa [#allocation4], 1
    %s984 = scalar_lea.sflag [#allocation4], 1
    %985 = vsyncpa %s984, 1

</llo_original>
